<compile_context>
chip_gen: v7x
topology: tpu7x:2x2x1
jax: 0.10.0
libtpu: 0.0.40
codegen_flags: <defaults>
</compile_context>

<pallas_src>
import functools

import jax
import jax.numpy as jnp
from jax.experimental import pallas as pl
from jax.experimental.pallas import tpu as pltpu


def _round_up(x, m):
    return (x + m - 1) // m * m


# ------------- Phase 1a: conv GEMM + stats, single resident K block ---------- #
def _conv_stats_kernel_1k(p_ref, w_ref, conv_ref, stats_ref):
    """(TM, K) x (K, Cp) full-K matmul; emit bf16 conv tile + f32 channel stats."""
    acc = jnp.dot(p_ref[...], w_ref[...], preferred_element_type=jnp.float32)
    conv_ref[...] = acc.astype(conv_ref.dtype)
    stats_ref[:, 0, :] = jnp.sum(acc, axis=0, keepdims=True)        # (1, Cp)
    stats_ref[:, 1, :] = jnp.sum(acc * acc, axis=0, keepdims=True)  # (1, Cp)


# ------------- Phase 1b: conv GEMM + stats, K-tiled with f32 accumulator ----- #
def _conv_stats_kernel_nk(p_ref, w_ref, conv_ref, stats_ref, acc_ref):
    k = pl.program_id(1)

    @pl.when(k == 0)
    def _():
        acc_ref[...] = jnp.zeros_like(acc_ref)

    acc_ref[...] += jnp.dot(p_ref[...], w_ref[...],
                            preferred_element_type=jnp.float32)

    @pl.when(k == pl.num_programs(1) - 1)
    def _():
        acc = acc_ref[...]
        conv_ref[...] = acc.astype(conv_ref.dtype)          # downcast to bf16
        stats_ref[:, 0, :] = jnp.sum(acc, axis=0, keepdims=True)
        stats_ref[:, 1, :] = jnp.sum(acc * acc, axis=0, keepdims=True)


# ------------------------ Phase 2: folded BN + LeakyReLU --------------------- #
def _bn_act_kernel(conv_ref, scale_ref, shift_ref, o_ref, *, slope):
    """y = conv * scale + shift (BN affine folded), then LeakyReLU(slope)."""
    y = conv_ref[...].astype(jnp.float32) * scale_ref[...] + shift_ref[...]
    o_ref[...] = jnp.maximum(y, slope * y).astype(o_ref.dtype)


# --------------------------------- Wrapper ----------------------------------- #
def cnn_block_forward(x_nchw, weight, gamma, beta, *, stride, eps=1e-5, slope=0.2):
    """x_nchw: (N, Cin, H, W); weight: (Cout, Cin, 4, 4); gamma/beta: (Cout,)."""
    N, Cin, H, W = x_nchw.shape
    Cout, _, KH, KW = weight.shape
    pad = 1

    # --- layout glue (XLA) ----------------------------------------------------
    # TODO(synk): when CNNBlocks are stacked, keep activations NHWC end-to-end.
    x = jnp.transpose(x_nchw, (0, 2, 3, 1)).astype(jnp.bfloat16)
    x_pad = jnp.pad(x, ((0, 0), (pad, pad), (pad, pad), (0, 0)), mode="reflect")

    OH = (H + 2 * pad - KH) // stride + 1
    OW = (W + 2 * pad - KW) // stride + 1
    M = N * OH * OW
    K = KH * KW * Cin

    # im2col patch matrix (M, K), formed directly in bf16.
    cols = []
    for ki in range(KH):
        for kj in range(KW):
            cols.append(
                x_pad[:, ki:ki + stride * OH:stride, kj:kj + stride * OW:stride, :])
    patches = jnp.stack(cols, axis=3).reshape(M, K)

    # Weight (Cout, Cin, KH, KW) -> (KH, KW, Cin, Cout) -> (K, Cout), bf16.
    w2d = jnp.transpose(weight, (2, 3, 1, 0)).reshape(K, Cout).astype(jnp.bfloat16)

    # --- tiling ----------------------------------------------------------------
    Cp = _round_up(Cout, 128)                 # lane-dense output / MXU N dim

    m16 = _round_up(M, 16)                    # bf16 sublane pack granularity
    TM = m16
    for cand in (512, 256, 128, 64, 32, 16):  # cap TM so n_m >= 2 when possible
        if m16 >= 2 * cand:
            TM = cand
            break
    M_pad = _round_up(M, TM)
    n_m = M_pad // TM

    K_pad = _round_up(K, 128)
    single_k = (K_pad <= 4096) and (K_pad * Cp * 2 <= (8 << 20))
    if single_k:
        TK = K_pad
        n_k = 1
    else:
        TK = 1024
        K_pad = _round_up(K, TK)
        n_k = K_pad // TK

    # Phase-2 gets its own, larger M tile (pure mem-bound elementwise pass).
    TM2 = TM
    while TM2 * 2 <= 2048 and M_pad % (TM2 * 2) == 0:
        TM2 *= 2
    n_m2 = M_pad // TM2

    # Zero-pad operands (bf16 throughout; pad rows are exactly zero -> stats OK).
    patches_p = jnp.pad(patches, ((0, M_pad - M), (0, K_pad - K)))
    w_p = jnp.pad(w2d, ((0, K_pad - K), (0, Cp - Cout)))
    gamma_p = jnp.pad(gamma.astype(jnp.float32), (0, Cp - Cout))
    beta_p = jnp.pad(beta.astype(jnp.float32), (0, Cp - Cout))

    # VMEM budget: double-buffered blocks (+ f32 accumulator when K is tiled),
    # with margin; clamped to 48 MiB so it also fits v7x's 64 MiB/TC.
    est_p1 = (2 * TM * TK * 2
              + (1 if n_k == 1 else 2) * TK * Cp * 2
              + 2 * TM * Cp * 2
              + 2 * 2 * Cp * 4
              + (0 if n_k == 1 else TM * Cp * 4))
    est_p2 = 2 * (TM2 * Cp * 2 + TM2 * Cp * 4 + 2 * Cp * 4)
    vmem_limit = int(min(max(2 * max(est_p1, est_p2) + (8 << 20), 16 << 20),
                         48 << 20))

    # --- Phase 1: tiled conv GEMM + per-tile channel stats ---------------------
    out_shapes = (
        jax.ShapeDtypeStruct((M_pad, Cp), jnp.bfloat16),     # conv (bf16 in HBM)
        jax.ShapeDtypeStruct((n_m, 2, Cp), jnp.float32),     # per-tile (sum, sumsq)
    )
    if n_k == 1:
        conv_out, stats = pl.pallas_call(
            _conv_stats_kernel_1k,
            out_shape=out_shapes,
            grid=(n_m,),
            in_specs=[
                pl.BlockSpec((TM, TK), lambda i: (i, 0)),
                pl.BlockSpec((TK, Cp), lambda i: (0, 0)),    # resident weight
            ],
            out_specs=(
                pl.BlockSpec((TM, Cp), lambda i: (i, 0)),
                pl.BlockSpec((1, 2, Cp), lambda i: (i, 0, 0)),
            ),
            compiler_params=pltpu.CompilerParams(
                dimension_semantics=("parallel",),
                vmem_limit_bytes=vmem_limit,
            ),
        )(patches_p, w_p)
    else:
        conv_out, stats = pl.pallas_call(
            _conv_stats_kernel_nk,
            out_shape=out_shapes,
            grid=(n_m, n_k),
            in_specs=[
                pl.BlockSpec((TM, TK), lambda i, k: (i, k)),
                pl.BlockSpec((TK, Cp), lambda i, k: (k, 0)),
            ],
            out_specs=(
                pl.BlockSpec((TM, Cp), lambda i, k: (i, 0)),
                pl.BlockSpec((1, 2, Cp), lambda i, k: (i, 0, 0)),
            ),
            scratch_shapes=[pltpu.VMEM((TM, Cp), jnp.float32)],
            compiler_params=pltpu.CompilerParams(
                dimension_semantics=("parallel", "arbitrary"),
                vmem_limit_bytes=vmem_limit,
            ),
        )(patches_p, w_p)

    # --- tiny JAX reduction: fold BN into per-channel scale/shift --------------
    # TODO(synk): E[x^2]-E[x]^2 in f32 can cancel for large-mean conv outputs;
    # switch to a mean-subtracted second pass if tight BN parity is required.
    count = jnp.float32(M)                       # real rows only (pad rows are 0)
    ch_sum = jnp.sum(stats[:, 0, :], axis=0)
    ch_sumsq = jnp.sum(stats[:, 1, :], axis=0)
    mean = ch_sum / count
    var = jnp.maximum(ch_sumsq / count - mean * mean, 0.0)   # biased, train-mode BN
    scale = gamma_p * jax.lax.rsqrt(var + eps)
    shift = beta_p - mean * scale
    scale2d = scale.reshape(1, Cp)
    shift2d = shift.reshape(1, Cp)

    # --- Phase 2: folded affine + LeakyReLU, large M tiles ---------------------
    y_pad = pl.pallas_call(
        functools.partial(_bn_act_kernel, slope=slope),
        out_shape=jax.ShapeDtypeStruct((M_pad, Cp), jnp.float32),
        grid=(n_m2,),
        in_specs=[
            pl.BlockSpec((TM2, Cp), lambda i: (i, 0)),
            pl.BlockSpec((1, Cp), lambda i: (0, 0)),
            pl.BlockSpec((1, Cp), lambda i: (0, 0)),
        ],
        out_specs=pl.BlockSpec((TM2, Cp), lambda i: (i, 0)),
        compiler_params=pltpu.CompilerParams(
            dimension_semantics=("parallel",),
            vmem_limit_bytes=vmem_limit,
        ),
    )(conv_out, scale2d, shift2d)

    # Slice off the lane/row padding, back to NCHW (f32, matching the module).
    out = y_pad[:M, :Cout].reshape(N, OH, OW, Cout)
    return jnp.transpose(out, (0, 3, 1, 2))


# ---------------------------------- Demo ------------------------------------- #
if __name__ == "__main__":
    key = jax.random.PRNGKey(0)
    k_x, k_w, k_g, k_b = jax.random.split(key, 4)

    N, Cin, H, W = 2, 4, 16, 16
    Cout, stride = 8, 2

    x = jax.random.normal(k_x, (N, Cin, H, W), dtype=jnp.float32)
    weight = 0.1 * jax.random.normal(k_w, (Cout, Cin, 4, 4), dtype=jnp.float32)
    gamma = 1.0 + 0.05 * jax.random.normal(k_g, (Cout,), dtype=jnp.float32)
    beta = 0.05 * jax.random.normal(k_b, (Cout,), dtype=jnp.float32)

    y = cnn_block_forward(x, weight, gamma, beta, stride=stride)
    jax.block_until_ready(y)

    assert y.shape == (N, Cout, H // stride, W // stride)
    assert bool(jnp.all(jnp.isfinite(y)))

    # Loose pure-JAX reference (kernel uses bf16 operands/intermediate, f32 acc).
    def ref_forward(x, w, g, b):
        xp = jnp.pad(jnp.transpose(x, (0, 2, 3, 1)),
                     ((0, 0), (1, 1), (1, 1), (0, 0)), mode="reflect")
        conv = jax.lax.conv_general_dilated(
            xp, jnp.transpose(w, (2, 3, 1, 0)), (stride, stride), "VALID",
            dimension_numbers=("NHWC", "HWIO", "NHWC"))
        mean = jnp.mean(conv, axis=(0, 1, 2))
        var = jnp.mean((conv - mean) ** 2, axis=(0, 1, 2))
        yh = (conv - mean) * jax.lax.rsqrt(var + 1e-5) * g + b
        yh = jnp.where(yh > 0, yh, 0.2 * yh)
        return jnp.transpose(yh, (0, 3, 1, 2))

    y_ref = ref_forward(x, weight, gamma, beta)
    err = float(jnp.max(jnp.abs(y - y_ref)))
    assert err < 0.15, f"max abs err {err}"
    print("KERNEL_OK")
</pallas_src>

<mosaic_0001>
module attributes {stable_mosaic.version = 11 : i64} {
  func.func @_conv_stats_kernel_1k(%arg0: i32, %arg1: memref<64x128xbf16, #tpu.memory_space<vmem>>, %arg2: memref<128x128xbf16, #tpu.memory_space<vmem>>, %arg3: memref<64x128xbf16, #tpu.memory_space<vmem>>, %arg4: memref<1x2x128xf32, #tpu.memory_space<vmem>>) attributes {dimension_semantics = [#tpu.dimension_semantics<parallel>], iteration_bounds = array<i64: 2>, scalar_prefetch = 0 : i64, scratch_operands = 0 : i64, tpu.core_type = #tpu.core_type<tc>, window_params = [{transform_indices = @transform_0, window_bounds = array<i64: 64, 128>}, {pipeline_mode = #tpu.pipeline_mode<synchronous>, transform_indices = @transform_1, window_bounds = array<i64: 128, 128>}, {transform_indices = @transform_2, window_bounds = array<i64: 64, 128>}, {transform_indices = @transform_3, window_bounds = array<i64: 1, 2, 128>}]} {
    %c0 = arith.constant 0 : index
    %c0_0 = arith.constant 0 : index
    %0 = vector.load %arg1[%c0, %c0_0] : memref<64x128xbf16, #tpu.memory_space<vmem>>, vector<64x128xbf16>
    %c0_1 = arith.constant 0 : index
    %c0_2 = arith.constant 0 : index
    %1 = vector.load %arg2[%c0_1, %c0_2] : memref<128x128xbf16, #tpu.memory_space<vmem>>, vector<128x128xbf16>
    %cst = arith.constant dense<0.000000e+00> : vector<64x128xf32>
    %2 = tpu.matmul %0, %1, %cst {dimension_numbers = #tpu.dot_dimension_numbers<[1], [0], [0], [1], [0, 0, 1, 1], [], []>} : vector<64x128xbf16>, vector<128x128xbf16>, vector<64x128xf32> -> vector<64x128xf32>
    %3 = arith.truncf %2 : vector<64x128xf32> to vector<64x128xbf16>
    %c0_3 = arith.constant 0 : index
    %c0_4 = arith.constant 0 : index
    %4 = vector.load %arg3[%c0_3, %c0_4] : memref<64x128xbf16, #tpu.memory_space<vmem>>, vector<64x128xbf16>
    tpu.vector_store %arg3[%c0_3, %c0_4], %3 {strides = array<i32>} : memref<64x128xbf16, #tpu.memory_space<vmem>>, vector<64x128xbf16>,
    %cst_5 = arith.constant dense<0.000000e+00> : vector<128xf32>
    %5 = vector.multi_reduction <add>, %2, %cst_5 [0] : vector<64x128xf32> to vector<128xf32>
    %6 = vector.shape_cast %5 : vector<128xf32> to vector<1x128xf32>
    %c0_6 = arith.constant 0 : index
    %c0_7 = arith.constant 0 : index
    %c0_8 = arith.constant 0 : index
    %7 = vector.load %arg4[%c0_6, %c0_7, %c0_8] : memref<1x2x128xf32, #tpu.memory_space<vmem>>, vector<1x1x128xf32>
    %8 = vector.shape_cast %7 : vector<1x1x128xf32> to vector<1x128xf32>
    %9 = vector.shape_cast %6 : vector<1x128xf32> to vector<1x1x128xf32>
    tpu.vector_store %arg4[%c0_6, %c0_7, %c0_8], %9 {strides = array<i32>} : memref<1x2x128xf32, #tpu.memory_space<vmem>>, vector<1x1x128xf32>,
    %10 = arith.mulf %2, %2 : vector<64x128xf32>
    %cst_9 = arith.constant dense<0.000000e+00> : vector<128xf32>
    %11 = vector.multi_reduction <add>, %10, %cst_9 [0] : vector<64x128xf32> to vector<128xf32>
    %12 = vector.shape_cast %11 : vector<128xf32> to vector<1x128xf32>
    %c0_10 = arith.constant 0 : index
    %c1 = arith.constant 1 : index
    %c0_11 = arith.constant 0 : index
    %13 = vector.load %arg4[%c0_10, %c1, %c0_11] : memref<1x2x128xf32, #tpu.memory_space<vmem>>, vector<1x1x128xf32>
    %14 = vector.shape_cast %13 : vector<1x1x128xf32> to vector<1x128xf32>
    %15 = vector.shape_cast %12 : vector<1x128xf32> to vector<1x1x128xf32>
    tpu.vector_store %arg4[%c0_10, %c1, %c0_11], %15 {strides = array<i32>} : memref<1x2x128xf32, #tpu.memory_space<vmem>>, vector<1x1x128xf32>,
    return
  }
  func.func @transform_0(%arg0: i32) -> (i32, i32) {
    %c0_i32 = arith.constant 0 : i32
    %c0_i32_0 = arith.constant 0 : i32
    return %arg0, %c0_i32 : i32, i32
  }
  func.func @transform_1(%arg0: i32) -> (i32, i32) {
    %c0_i32 = arith.constant 0 : i32
    %c0_i32_0 = arith.constant 0 : i32
    %c0_i32_1 = arith.constant 0 : i32
    return %c0_i32, %c0_i32_0 : i32, i32
  }
  func.func @transform_2(%arg0: i32) -> (i32, i32) {
    %c0_i32 = arith.constant 0 : i32
    %c0_i32_0 = arith.constant 0 : i32
    return %arg0, %c0_i32 : i32, i32
  }
  func.func @transform_3(%arg0: i32) -> (i32, i32, i32) {
    %c0_i32 = arith.constant 0 : i32
    %c0_i32_0 = arith.constant 0 : i32
    %c0_i32_1 = arith.constant 0 : i32
    return %arg0, %c0_i32, %c0_i32_0 : i32, i32, i32
  }
}

</mosaic_0001>

<llo_original>
// kernel: tpu_custom_call.1
$region0: #{tpu_custom_call.1}
  #allocation0 [shape = 'u32[]', space=smem, size = 0x4, offset = 0x4, fixed_abs, tag = 'smem constant byte address 0x4 - core index']
  #allocation1 [shape = 'u32[144,128]{1,0:T(1,128)}', space=vmem, size = 0x12000, scoped, tag = 'internal scratch']
  %s0 = inlined_call_operand.hbm [shape: bf16[128,128], index: 0, kind: input, shape index: {}]
  %s1 = inlined_call_operand.hbm [shape: bf16[128,128], index: 1, kind: input, shape index: {}]
  %s2 = inlined_call_operand.hbm [shape: bf16[128,128], index: 2, kind: output, shape index: {0}]
  %s3 = inlined_call_operand.hbm [shape: f32[2,2,128], index: 3, kind: output, shape index: {1}]
  %4 = xla_tuple %s2, %s3
  %s5 = sld [smem:[#allocation0]]
  $region57: #{tpu_custom_call.1} parent=0
    _
  %s7 = ssub.s32 1, %s5
  %s8 = scalar_select 0, %s7, %s5
  $region1: #{tpu_custom_call.1} parent=0
    #allocation2 [shape = 'u8[32768]{0}', space=vmem, size = 0x8000, scoped, tag = 'input window, operand 0']
    #allocation3 [shape = 's32[2]{0}', space=sflag, size = 0x8, scoped, tag = 'scoped memory for tpu_custom_call.1']
    #allocation4 [shape = 's32[2]{0}', space=sflag, size = 0x8, scoped, tag = 'scoped memory for tpu_custom_call.1']
    #allocation5 [shape = 'u8[32768]{0}', space=vmem, size = 0x8000, scoped, tag = 'input window, operand 1, single buffered']
    #allocation6 [shape = 's32[1]{0}', space=sflag, size = 0x4, scoped, tag = 'scoped memory for tpu_custom_call.1']
    #allocation7 [shape = 'u8[32768]{0}', space=vmem, size = 0x8000, scoped, tag = 'output window, operand 0']
    #allocation8 [shape = 'u8[2048]{0}', space=vmem, size = 0x800, scoped, tag = 'output window, operand 1']
    #allocation9 [shape = 's32[2]{0}', space=sflag, size = 0x8, scoped, tag = 'scoped memory for tpu_custom_call.1']
    %9 = vsyncpa [#allocation3], 0
    %s10 = scalar_lea.sflag [#allocation3], 1
    %11 = vsyncpa %s10, 0
    %12 = vsyncpa [#allocation6], 0
    %13 = vsyncpa [#allocation4], 0
    %s14 = scalar_lea.sflag [#allocation4], 1
    %15 = vsyncpa %s14, 0
    %16 = vsyncpa [#allocation9], 0
    %s17 = scalar_lea.sflag [#allocation9], 1
    %18 = vsyncpa %s17, 0
    loop: start=0, step=1, limit=4
    $region2: #{tpu_custom_call.1} parent=1 // loop_pre_header
      _
    $region3: #{tpu_custom_call.1} parent=1 // loop_header
      %s20 = sphi 0, %s24
      %p21 = scmp.ge.s32.totalorder %s20, 4
      %s30 = sphi 0, %s32
      %s33 = sphi 0, %s30
      %s34 = sphi 0, %s33
      %s50 = sphi 0, %s34
      %s54 = sphi 0, %s54
      %s56 = sphi 0, %s54
      %s57 = sphi 0, %s56
      %s71 = sphi 0, %s57
      %s77 = sphi 0, %s79
      %s80 = sphi 0, %s77
      %s81 = sphi 0, %s80
      %s97 = sphi 0, %s81
      %s103 = sphi 0, %s105
      %s106 = sphi 0, %s103
      %s107 = sphi 0, %s106
      %s123 = sphi 0, %s107
    $region4: #{tpu_custom_call.1} parent=1 // loop_header_branch
      %23 = sbr.rel (%p21) target = $region8
    $region5: #{tpu_custom_call.1} parent=1 // loop_body
      %s25 = ssub.s32 %s20, 1
      %s26 = ssub.s32 %s20, 2
      %s27 = sadd.s32 %s20, 1
      %s28 = ssub.s32 %s20, %s27
      %p29 = scmp.eq.s32.totalorder %s28, 0
      %s31 = sadd.s32 %s30, 1
      %s32 = scalar_select %p29, %s30, %s31
      %p35 = pneg %p29
      %p36 = scmp.eq.s32.totalorder %s20, 1
      %p37 = por %p35, %p36
      %p38 = scmp.ne.s32.totalorder %s30, %s33
      %p39 = scmp.eq.s32.totalorder %s20, 0
      %p40 = por %p38, %p39
      %p41 = scmp.ne.s32.totalorder %s30, %s33
      %p42 = scmp.eq.s32.totalorder %s25, 1
      %p43 = por %p41, %p42
      %p44 = scmp.ne.s32.totalorder %s33, %s34
      %p45 = scmp.eq.s32.totalorder %s25, 0
      %p46 = por %p44, %p45
      %p47 = scmp.ne.s32.totalorder %s33, %s34
      %p48 = scmp.eq.s32.totalorder %s26, 1
      %p49 = por %p47, %p48
      %p51 = scmp.ne.s32.totalorder %s34, %s50
      %p52 = scmp.eq.s32.totalorder %s26, 0
      %p53 = por %p51, %p52
      %s55 = sadd.s32 %s54, 1
      %p58 = scmp.eq.s32.totalorder %s20, 1
      %p59 = scmp.ne.s32.totalorder %s54, %s56
      %p60 = scmp.eq.s32.totalorder %s20, 0
      %p61 = por %p59, %p60
      %p62 = scmp.ne.s32.totalorder %s54, %s56
      %p63 = scmp.eq.s32.totalorder %s25, 1
      %p64 = por %p62, %p63
      %p65 = scmp.ne.s32.totalorder %s56, %s57
      %p66 = scmp.eq.s32.totalorder %s25, 0
      %p67 = por %p65, %p66
      %p68 = scmp.ne.s32.totalorder %s56, %s57
      %p69 = scmp.eq.s32.totalorder %s26, 1
      %p70 = por %p68, %p69
      %p72 = scmp.ne.s32.totalorder %s57, %s71
      %p73 = scmp.eq.s32.totalorder %s26, 0
      %p74 = por %p72, %p73
      %s75 = ssub.s32 %s20, %s27
      %p76 = scmp.eq.s32.totalorder %s75, 0
      %s78 = sadd.s32 %s77, 1
      %s79 = scalar_select %p76, %s77, %s78
      %p82 = pneg %p76
      %p83 = scmp.eq.s32.totalorder %s20, 1
      %p84 = por %p82, %p83
      %p85 = scmp.ne.s32.totalorder %s77, %s80
      %p86 = scmp.eq.s32.totalorder %s20, 0
      %p87 = por %p85, %p86
      %p88 = scmp.ne.s32.totalorder %s77, %s80
      %p89 = scmp.eq.s32.totalorder %s25, 1
      %p90 = por %p88, %p89
      %p91 = scmp.ne.s32.totalorder %s80, %s81
      %p92 = scmp.eq.s32.totalorder %s25, 0
      %p93 = por %p91, %p92
      %p94 = scmp.ne.s32.totalorder %s80, %s81
      %p95 = scmp.eq.s32.totalorder %s26, 1
      %p96 = por %p94, %p95
      %p98 = scmp.ne.s32.totalorder %s81, %s97
      %p99 = scmp.eq.s32.totalorder %s26, 0
      %p100 = por %p98, %p99
      %s101 = ssub.s32 %s20, %s27
      %p102 = scmp.eq.s32.totalorder %s101, 0
      %s104 = sadd.s32 %s103, 1
      %s105 = scalar_select %p102, %s103, %s104
      %p108 = pneg %p102
      %p109 = scmp.eq.s32.totalorder %s20, 1
      %p110 = por %p108, %p109
      %p111 = scmp.ne.s32.totalorder %s103, %s106
      %p112 = scmp.eq.s32.totalorder %s20, 0
      %p113 = por %p111, %p112
      %p114 = scmp.ne.s32.totalorder %s103, %s106
      %p115 = scmp.eq.s32.totalorder %s25, 1
      %p116 = por %p114, %p115
      %p117 = scmp.ne.s32.totalorder %s106, %s107
      %p118 = scmp.eq.s32.totalorder %s25, 0
      %p119 = por %p117, %p118
      %p120 = scmp.ne.s32.totalorder %s106, %s107
      %p121 = scmp.eq.s32.totalorder %s26, 1
      %p122 = por %p120, %p121
      %p124 = scmp.ne.s32.totalorder %s107, %s123
      %p125 = scmp.eq.s32.totalorder %s26, 0
      %p126 = por %p124, %p125
      %p127 = scmp.le.s32.totalorder 1, %s20
      %p128 = scmp.lt.s32.totalorder %s20, 3
      %p129 = pnand %p127, %p128
      %p130 = pneg %p129
      // Predicated region
      $region9: #{tpu_custom_call.1} parent=5 // pred_check
        _
      $region10: #{tpu_custom_call.1} parent=5 // pred_check_branch
        %132 = sbr.rel (%p129) target = $region12
      $region11: #{tpu_custom_call.1} parent=5 // pred_region
        %s133 = ssub.s32 %s20, 1
        // Predicated region
        $region13: #{tpu_custom_call.1} parent=11 // pred_check
          %p134 = pneg %p67
        $region14: #{tpu_custom_call.1} parent=11 // pred_check_branch
          %136 = sbr.rel (%p134) target = $region16
        $region15: #{tpu_custom_call.1} parent=11 // pred_region
          %s138 = ssub.s32 1024, 1024
          %139 = vsyncadd [#allocation6], %s138
          %s140 = sshll.u32 [#allocation5], 4
          %s141 = int_to_ptr.vmem [resolvable:$true] %s140
          %146 = dma.hbm_to_vmem [thread:$0]  %s1, 1024, %s141, [#allocation6], 64, 64, 4
        $region16: #{tpu_custom_call.1} parent=11 // pred_fallthru
          _
      $region12: #{tpu_custom_call.1} parent=5 // pred_fallthru
        _
      %p147 = scmp.lt.s32.totalorder %s20, 2
      // Predicated region
      $region17: #{tpu_custom_call.1} parent=5 // pred_check
        %p148 = pneg %p147
      $region18: #{tpu_custom_call.1} parent=5 // pred_check_branch
        %150 = sbr.rel (%p148) target = $region20
      $region19: #{tpu_custom_call.1} parent=5 // pred_region
        // Predicated region
        $region21: #{tpu_custom_call.1} parent=19 // pred_check
          %p151 = pneg %p40
        $region22: #{tpu_custom_call.1} parent=19 // pred_check_branch
          %153 = sbr.rel (%p151) target = $region24
        $region23: #{tpu_custom_call.1} parent=19 // pred_region
          %s154 = sand.u32 %s30, 1
          %s155 = scalar_lea.sflag [#allocation3], %s154
          %s156 = sand.u32 %s30, 1
          %s157 = smul.addr %s156, 32
          %s158 = scalar_lea.vmem [#allocation2], %s157
          %s159 = smul.u32 8, %s20
          %s161 = ssub.s32 512, 512
          %162 = vsyncadd %s155, %s161
          %s163 = smul.addr %s159, 64
          %s164 = scalar_lea.hbm %s0, %s163
          %s165 = sshll.u32 %s158, 4
          %s166 = int_to_ptr.vmem [resolvable:$true] %s165
          %171 = dma.hbm_to_vmem [thread:$0]  %s164, 512, %s166, %s155, 64, 64, 4
        $region24: #{tpu_custom_call.1} parent=19 // pred_fallthru
          _
      $region20: #{tpu_custom_call.1} parent=5 // pred_fallthru
        _
      %p172 = scmp.le.s32.totalorder 1, %s20
      %p173 = scmp.lt.s32.totalorder %s20, 3
      %p174 = pnand %p172, %p173
      %p175 = pneg %p174
      // Predicated region
      $region25: #{tpu_custom_call.1} parent=5 // pred_check
        _
      $region26: #{tpu_custom_call.1} parent=5 // pred_check_branch
        %177 = sbr.rel (%p174) target = $region28
      $region27: #{tpu_custom_call.1} parent=5 // pred_region
        %s178 = ssub.s32 %s20, 1
        %s179 = sand.u32 %s33, 1
        %s180 = scalar_lea.sflag [#allocation3], %s179
        %s181 = sand.u32 %s33, 1
        %s182 = smul.addr %s181, 32
        %s183 = scalar_lea.vmem [#allocation2], %s182
        // Predicated region
        $region29: #{tpu_custom_call.1} parent=27 // pred_check
          %p184 = pneg %p46
        $region30: #{tpu_custom_call.1} parent=27 // pred_check_branch
          %186 = sbr.rel (%p184) target = $region32
        $region31: #{tpu_custom_call.1} parent=27 // pred_region
          %187 = dma.done %s180, 512
        $region32: #{tpu_custom_call.1} parent=27 // pred_fallthru
          _
        // Predicated region
        $region33: #{tpu_custom_call.1} parent=27 // pred_check
          %p188 = pneg %p67
        $region34: #{tpu_custom_call.1} parent=27 // pred_check_branch
          %190 = sbr.rel (%p188) target = $region36
        $region35: #{tpu_custom_call.1} parent=27 // pred_region
          %191 = dma.done [#allocation6], 1024
        $region36: #{tpu_custom_call.1} parent=27 // pred_fallthru
          _
        %s192 = sand.u32 %s33, 1
        %s193 = scalar_lea.sflag [#allocation3], %s192
        %s194 = sand.u32 %s33, 1
        %s195 = smul.addr %s194, 32
        %s196 = scalar_lea.vmem [#allocation2], %s195
        %p197 = pneg %p46
        %p198 = pneg %p43
        %p199 = pneg %p67
        %p200 = pneg %p64
        %p201 = pneg %p93
        %p202 = pneg %p90
        %s203 = sand.u32 %s80, 1
        %s204 = scalar_lea.sflag [#allocation4], %s203
        %s205 = sand.u32 %s80, 1
        %s206 = smul.addr %s205, 32
        %s207 = scalar_lea.vmem [#allocation7], %s206
        %p208 = pneg %p119
        %p209 = pneg %p116
        %s210 = sand.u32 %s106, 1
        %s211 = scalar_lea.sflag [#allocation9], %s210
        %s212 = sand.u32 %s106, 1
        %s213 = smul.addr %s212, 2
        %s214 = scalar_lea.vmem [#allocation8], %s213
        %s215 = smul.u32 8, %s25
        %s216 = smul.u32 8, %s25
        %v218 = vld [vmem:[%s183] sm:$0xf]
        %v219 = vld [vmem:[%s183 + $0x4] sm:$0xf]
        %v220 = vld [vmem:[%s183 + $0x8] sm:$0xf]
        %v221 = vld [vmem:[%s183 + $0xc] sm:$0xf]
        %v222 = vld [vmem:[%s183 + $0x10] sm:$0xf]
        %v223 = vld [vmem:[%s183 + $0x14] sm:$0xf]
        %v224 = vld [vmem:[%s183 + $0x18] sm:$0xf]
        %v225 = vld [vmem:[%s183 + $0x1c] sm:$0xf]
        %v226 = vld [vmem:[#allocation5] sm:$0xf]
        %v227 = vld [vmem:[#allocation5 + $0x4] sm:$0xf]
        %v228 = vld [vmem:[#allocation5 + $0x8] sm:$0xf]
        %v229 = vld [vmem:[#allocation5 + $0xc] sm:$0xf]
        %v230 = vld [vmem:[#allocation5 + $0x10] sm:$0xf]
        %v231 = vld [vmem:[#allocation5 + $0x14] sm:$0xf]
        %v232 = vld [vmem:[#allocation5 + $0x18] sm:$0xf]
        %v233 = vld [vmem:[#allocation5 + $0x1c] sm:$0xf]
        %v234 = vld [vmem:[#allocation5 + $0x20] sm:$0xf]
        %v235 = vld [vmem:[#allocation5 + $0x24] sm:$0xf]
        %v236 = vld [vmem:[#allocation5 + $0x28] sm:$0xf]
        %v237 = vld [vmem:[#allocation5 + $0x2c] sm:$0xf]
        %v238 = vld [vmem:[#allocation5 + $0x30] sm:$0xf]
        %v239 = vld [vmem:[#allocation5 + $0x34] sm:$0xf]
        %v240 = vld [vmem:[#allocation5 + $0x38] sm:$0xf]
        %v241 = vld [vmem:[#allocation5 + $0x3c] sm:$0xf]
        %v250 = vunpack.c.l.b16 %v218
        %v251 = vunpack.c.l.b16 %v219
        %v252 = vunpack.c.l.b16 %v220
        %v253 = vunpack.c.l.b16 %v221
        %v254 = vunpack.c.l.b16 %v222
        %v255 = vunpack.c.l.b16 %v223
        %v256 = vunpack.c.l.b16 %v224
        %v257 = vunpack.c.l.b16 %v225
        %v258 = vpack.c.b16 %v251, %v250
        %v259 = vpack.c.b16 %v253, %v252
        %v260 = vpack.c.b16 %v255, %v254
        %v261 = vpack.c.b16 %v257, %v256
        %v282 = vunpack.c.l.b16 %v226
        %v283 = vunpack.c.l.b16 %v227
        %v284 = vunpack.c.l.b16 %v228
        %v285 = vunpack.c.l.b16 %v229
        %v286 = vunpack.c.l.b16 %v230
        %v287 = vunpack.c.l.b16 %v231
        %v288 = vunpack.c.l.b16 %v232
        %v289 = vunpack.c.l.b16 %v233
        %v290 = vunpack.c.l.b16 %v234
        %v291 = vunpack.c.l.b16 %v235
        %v292 = vunpack.c.l.b16 %v236
        %v293 = vunpack.c.l.b16 %v237
        %v294 = vunpack.c.l.b16 %v238
        %v295 = vunpack.c.l.b16 %v239
        %v296 = vunpack.c.l.b16 %v240
        %v297 = vunpack.c.l.b16 %v241
        %v298 = vpack.c.b16 %v283, %v282
        %v299 = vpack.c.b16 %v285, %v284
        %v300 = vpack.c.b16 %v287, %v286
        %v301 = vpack.c.b16 %v289, %v288
        %v302 = vpack.c.b16 %v291, %v290
        %v303 = vpack.c.b16 %v293, %v292
        %v304 = vpack.c.b16 %v295, %v294
        %v305 = vpack.c.b16 %v297, %v296
        %314 = vmatprep.subr.bf16.mxu0 0
        %315 = vmatpush1.bf16.msra.mxu0 %v298
        %316 = vmatprep.subr.bf16.mxu0 0
        %317 = vmatpush1.bf16.msra.mxu0 %v299
        %318 = vmatprep.subr.bf16.mxu0 0
        %319 = vmatpush1.bf16.msra.mxu0 %v300
        %320 = vmatprep.subr.bf16.mxu0 0
        %321 = vmatpush1.bf16.msra.mxu0 %v301
        %322 = vmatprep.subr.bf16.mxu0 0
        %323 = vmatpush1.bf16.msra.mxu0 %v302
        %324 = vmatprep.subr.bf16.mxu0 0
        %325 = vmatpush1.bf16.msra.mxu0 %v303
        %326 = vmatprep.subr.bf16.mxu0 0
        %327 = vmatpush1.bf16.msra.mxu0 %v304
        %328 = vmatprep.subr.bf16.mxu0 0
        %329 = vmatpush1.bf16.msra.mxu0 %v305
        %330 = vmatprep.subr.bf16.mxu0 0
        %331 = vmatpush1.bf16.msra.mxu0 0
        %332 = vmatprep.subr.bf16.mxu0 0
        %333 = vmatpush1.bf16.msra.mxu0 0
        %334 = vmatprep.subr.bf16.mxu0 0
        %335 = vmatpush1.bf16.msra.mxu0 0
        %336 = vmatprep.subr.bf16.mxu0 0
        %337 = vmatpush1.bf16.msra.mxu0 0
        %338 = vmatprep.subr.bf16.mxu0 0
        %339 = vmatpush1.bf16.msra.mxu0 0
        %340 = vmatprep.subr.bf16.mxu0 0
        %341 = vmatpush1.bf16.msra.mxu0 0
        %342 = vmatprep.subr.bf16.mxu0 0
        %343 = vmatpush1.bf16.msra.mxu0 0
        %344 = vmatprep.subr.bf16.mxu0 0
        %345 = vmatpush1.bf16.msra.mxu0 0
        %346 = vmatprep.mubr.bf16.mxu0 0
        %347 = vmatmul.mubr.bf16.gmra.mrb[0].mxu0 %v258
        %v348 = vpop.f32.mrb[0].mxu0
        %v349 = vadd.f32 0.0, %v348
        %v350 = vpop.f32.mrb[0].mxu0
        %v351 = vpop.f32.mrb[0].mxu0
        %v352 = vadd.f32 0.0, %v351
        %v353 = vpop.f32.mrb[0].mxu0
        %354 = vmatprep.mubr.bf16.mxu0 0
        %355 = vmatmul.mubr.bf16.gmra.mrb[0].mxu0 %v259
        %v356 = vpop.f32.mrb[0].mxu0
        %v357 = vadd.f32 0.0, %v356
        %v358 = vpop.f32.mrb[0].mxu0
        %v359 = vpop.f32.mrb[0].mxu0
        %v360 = vadd.f32 0.0, %v359
        %v361 = vpop.f32.mrb[0].mxu0
        %362 = vmatprep.mubr.bf16.mxu0 0
        %363 = vmatmul.mubr.bf16.gmra.mrb[0].mxu0 %v260
        %v364 = vpop.f32.mrb[0].mxu0
        %v365 = vadd.f32 0.0, %v364
        %v366 = vpop.f32.mrb[0].mxu0
        %v367 = vpop.f32.mrb[0].mxu0
        %v368 = vadd.f32 0.0, %v367
        %v369 = vpop.f32.mrb[0].mxu0
        %370 = vmatprep.mubr.bf16.mxu0 0
        %371 = vmatmul.mubr.bf16.gmra.mrb[0].mxu0 %v261
        %v372 = vpop.f32.mrb[0].mxu0
        %v373 = vadd.f32 0.0, %v372
        %v374 = vpop.f32.mrb[0].mxu0
        %v375 = vpop.f32.mrb[0].mxu0
        %v376 = vadd.f32 0.0, %v375
        %v377 = vpop.f32.mrb[0].mxu0
        %378 = vdwg.mxu0
        %v379 = vpack.c.bf16 %v352, %v349
        %v380 = vpack.c.bf16 %v360, %v357
        %v381 = vpack.c.bf16 %v368, %v365
        %v382 = vpack.c.bf16 %v376, %v373
        %v387 = vunpack.c.l.b16 %v379
        %v388 = vunpack.c.h.b16 %v379
        %v389 = vunpack.c.l.b16 %v380
        %v390 = vunpack.c.h.b16 %v380
        %v391 = vunpack.c.l.b16 %v381
        %v392 = vunpack.c.h.b16 %v381
        %v393 = vunpack.c.l.b16 %v382
        %v394 = vunpack.c.h.b16 %v382
        %v395 = vpack.c.b16 %v387, %v387
        %v396 = vpack.c.b16 %v388, %v388
        %v397 = vpack.c.b16 %v389, %v389
        %v398 = vpack.c.b16 %v390, %v390
        %v399 = vpack.c.b16 %v391, %v391
        %v400 = vpack.c.b16 %v392, %v392
        %v401 = vpack.c.b16 %v393, %v393
        %v402 = vpack.c.b16 %v394, %v394
        %411 = vst [vmem:[%s207] sm:$0xf] %v395
        %412 = vst [vmem:[%s207 + $0x4] sm:$0xf] %v396
        %413 = vst [vmem:[%s207 + $0x8] sm:$0xf] %v397
        %414 = vst [vmem:[%s207 + $0xc] sm:$0xf] %v398
        %415 = vst [vmem:[%s207 + $0x10] sm:$0xf] %v399
        %416 = vst [vmem:[%s207 + $0x14] sm:$0xf] %v400
        %417 = vst [vmem:[%s207 + $0x18] sm:$0xf] %v401
        %418 = vst [vmem:[%s207 + $0x1c] sm:$0xf] %v402
        %v419 = vadd.f32 %v349, %v352
        %v420 = vadd.f32 %v419, %v357
        %v421 = vadd.f32 %v420, %v360
        %v422 = vadd.f32 %v421, %v365
        %v423 = vadd.f32 %v422, %v368
        %v424 = vadd.f32 %v423, %v373
        %v425 = vadd.f32 %v424, %v376
        %v426 = vrot.slane %v425, 4
        %v427 = vadd.f32 %v425, %v426
        %v428 = vrot.slane %v427, 2
        %v429 = vadd.f32 %v427, %v428
        %v430 = vrot.slane %v429, 1
        %v431 = vadd.f32 %v429, %v430
        %432 = vst [vmem:[%s214] sm:$0x1] %v431
        %v433 = vmul.f32 %v349, %v349
        %v434 = vmul.f32 %v352, %v352
        %v435 = vmul.f32 %v357, %v357
        %v436 = vmul.f32 %v360, %v360
        %v437 = vmul.f32 %v365, %v365
        %v438 = vmul.f32 %v368, %v368
        %v439 = vmul.f32 %v373, %v373
        %v440 = vmul.f32 %v376, %v376
        %v441 = vadd.f32 %v433, %v434
        %v442 = vadd.f32 %v441, %v435
        %v443 = vadd.f32 %v442, %v436
        %v444 = vadd.f32 %v443, %v437
        %v445 = vadd.f32 %v444, %v438
        %v446 = vadd.f32 %v445, %v439
        %v447 = vadd.f32 %v446, %v440
        %v448 = vrot.slane %v447, 4
        %v449 = vadd.f32 %v447, %v448
        %v450 = vrot.slane %v449, 2
        %v451 = vadd.f32 %v449, %v450
        %v452 = vrot.slane %v451, 1
        %v453 = vadd.f32 %v451, %v452
        %454 = vst [vmem:[%s214 + $0x1] sm:$0x1] %v453
        %s455 = sand.u32 %s80, 1
        %s456 = scalar_lea.sflag [#allocation4], %s455
        %s457 = sand.u32 %s80, 1
        %s458 = smul.addr %s457, 32
        %s459 = scalar_lea.vmem [#allocation7], %s458
        %s460 = sand.u32 %s106, 1
        %s461 = scalar_lea.sflag [#allocation9], %s460
        %s462 = sand.u32 %s106, 1
        %s463 = smul.addr %s462, 2
        %s464 = scalar_lea.vmem [#allocation8], %s463
        // Predicated region
        $region37: #{tpu_custom_call.1} parent=27 // pred_check
          %p465 = pneg %p90
        $region38: #{tpu_custom_call.1} parent=27 // pred_check_branch
          %467 = sbr.rel (%p465) target = $region40
        $region39: #{tpu_custom_call.1} parent=27 // pred_region
          %s468 = smul.u32 8, %s25
          %s470 = ssub.s32 512, 512
          %471 = vsyncadd %s456, %s470
          %s472 = smul.addr %s468, 64
          %s473 = scalar_lea.hbm %s2, %s472
          %s474 = sshll.u32 %s459, 4
          %s475 = int_to_ptr.vmem [resolvable:$true] %s474
          %480 = dma.vmem_to_hbm [thread:$0]  %s475, 512, %s473, %s456, 64, 64, 4
        $region40: #{tpu_custom_call.1} parent=27 // pred_fallthru
          _
        // Predicated region
        $region41: #{tpu_custom_call.1} parent=27 // pred_check
          %p481 = pneg %p116
        $region42: #{tpu_custom_call.1} parent=27 // pred_check_branch
          %483 = sbr.rel (%p481) target = $region44
        $region43: #{tpu_custom_call.1} parent=27 // pred_region
          %s485 = ssub.s32 32, 32
          %486 = vsyncadd %s461, %s485
          %s487 = smul.addr %s25, 32
          %s488 = scalar_lea.hbm %s3, %s487
          %s490 = sshll.u32 %s464, 4
          %s491 = int_to_ptr.vmem [resolvable:$true] %s490
          %493 = dma.vmem_to_hbm [thread:$0]  %s491, 32, %s488, %s461
        $region44: #{tpu_custom_call.1} parent=27 // pred_fallthru
          _
      $region28: #{tpu_custom_call.1} parent=5 // pred_fallthru
        _
      %p494 = scmp.le.s32.totalorder 2, %s20
      // Predicated region
      $region45: #{tpu_custom_call.1} parent=5 // pred_check
        %p495 = pneg %p494
      $region46: #{tpu_custom_call.1} parent=5 // pred_check_branch
        %497 = sbr.rel (%p495) target = $region48
      $region47: #{tpu_custom_call.1} parent=5 // pred_region
        %s498 = ssub.s32 %s20, 2
        // Predicated region
        $region49: #{tpu_custom_call.1} parent=47 // pred_check
          %p499 = pneg %p96
        $region50: #{tpu_custom_call.1} parent=47 // pred_check_branch
          %501 = sbr.rel (%p499) target = $region52
        $region51: #{tpu_custom_call.1} parent=47 // pred_region
          %s502 = sand.u32 %s81, 1
          %s503 = scalar_lea.sflag [#allocation4], %s502
          %s504 = sand.u32 %s81, 1
          %s505 = smul.addr %s504, 32
          %s506 = scalar_lea.vmem [#allocation7], %s505
          %507 = dma.done %s503, 512
        $region52: #{tpu_custom_call.1} parent=47 // pred_fallthru
          _
        // Predicated region
        $region53: #{tpu_custom_call.1} parent=47 // pred_check
          %p508 = pneg %p122
        $region54: #{tpu_custom_call.1} parent=47 // pred_check_branch
          %510 = sbr.rel (%p508) target = $region56
        $region55: #{tpu_custom_call.1} parent=47 // pred_region
          %s511 = sand.u32 %s107, 1
          %s512 = scalar_lea.sflag [#allocation9], %s511
          %s513 = sand.u32 %s107, 1
          %s514 = smul.addr %s513, 2
          %s515 = scalar_lea.vmem [#allocation8], %s514
          %516 = dma.done %s512, 32
        $region56: #{tpu_custom_call.1} parent=47 // pred_fallthru
          _
      $region48: #{tpu_custom_call.1} parent=5 // pred_fallthru
        _
    $region6: #{tpu_custom_call.1} parent=1 // loop_footer
      %s24 = sadd.s32 1, %s20
    $region7: #{tpu_custom_call.1} parent=1 // loop_footer_branch
      %19 = sbr.rel target = $region3
    $region8: #{tpu_custom_call.1} parent=1 // loop_exit
      _
    %517 = vsyncpa [#allocation3], 1
    %s518 = scalar_lea.sflag [#allocation3], 1
    %519 = vsyncpa %s518, 1
    %520 = vsyncpa [#allocation6], 1
    %521 = vsyncpa [#allocation4], 1
    %s522 = scalar_lea.sflag [#allocation4], 1
    %523 = vsyncpa %s522, 1
    %524 = vsyncpa [#allocation9], 1
    %s525 = scalar_lea.sflag [#allocation9], 1
    %526 = vsyncpa %s525, 1

</llo_original>
